<compile_context>
chip_gen: v5e
topology: v5e:2x2
jax: 0.10.0
libtpu: 0.0.40
codegen_flags: <defaults>
</compile_context>

<pallas_src>
import numpy as np
import jax
import jax.numpy as jnp
from jax.experimental import pallas as pl
from jax.experimental.pallas import tpu as pltpu


SUB = 8        # padded pooled-output rows   (N  -> 8, aligned store)
LANES = 128    # padded pooled-output lanes  (Co -> 128, lane-dense store)


def make_fused_forward(weight, bias, N, H, W):
    """weight: (Ci, Co, KH, KW), bias: (Co,). Returns a jitted fn of x:(N,Ci,H,W)."""
    weight = np.asarray(weight, np.float32)
    bias = np.asarray(bias, np.float32)
    Ci, Co, KH, KW = weight.shape
    Ho, Wo = H + KH - 1, W + KW - 1            # conv_transpose, stride 1, pad 0
    Hp = H + 2 * (KH - 1)                      # H zero-padded by KH-1 both sides
    KD = Ci * W                                # per-kernel-row contraction (ci, w)
    CD = Wo * Co                               # output columns (j, co) -- all real
    ROWS = N * Ho                              # output rows (n, i)
    assert Ho % 8 == 0, "kernel relies on Ho being a multiple of 8 for a free retile"

    # ---- constants built ONCE with NumPy (outside the trace) -----------------
    # Width-Toeplitz weight blocks, one per kernel row r:
    #   w2[r, ci*W + w, j*Co + co] = weight[ci, co, KH-1-r, j-w]  if 0 <= j-w < KW
    # so that  conv[(n,i),(j,co)] = bias[co] + sum_r xhp[n, i+r, (ci,w)] @ w2[r]
    w2_np = np.zeros((KH, KD, CD), np.float32)
    for r in range(KH):
        khr = KH - 1 - r
        for j in range(Wo):
            for wi in range(W):
                kwr = j - wi
                if 0 <= kwr < KW:
                    w2_np[r, wi::W, j * Co:(j + 1) * Co] = weight[:, :, khr, kwr]
    w2 = jnp.asarray(w2_np)

    bias2 = jnp.asarray(np.tile(bias, Wo).reshape(1, CD))      # [0, j*Co+co] = bias[co]

    p_np = np.zeros((SUB, ROWS), np.float32)                   # per-batch row averaging
    for b in range(N):
        p_np[b, b * Ho:(b + 1) * Ho] = 1.0 / (Ho * Wo)
    poolP = jnp.asarray(p_np)

    q_np = np.zeros((CD, LANES), np.float32)                   # sum over j, keep co
    for j in range(Wo):
        q_np[j * Co:(j + 1) * Co, :Co] = np.eye(Co, dtype=np.float32)
    poolQ = jnp.asarray(q_np)

    # ---- kernel ---------------------------------------------------------------
    def kernel(x2_ref, w2_ref, bias_ref, p_ref, q_ref, o_ref, xhp_ref, acc_ref):
        r = pl.program_id(0)

        @pl.when(r == 0)
        def _init():
            # H-padded activation slab (pad rows are exact zeros) + zero accumulator.
            xhp_ref[...] = jnp.zeros_like(xhp_ref)
            xhp_ref[:, KH - 1:KH - 1 + H, :] = x2_ref[...]
            acc_ref[...] = jnp.zeros_like(acc_ref)

        # Contribution of kernel row r: a single MXU matmul against the
        # width-Toeplitz block. Slicing the H window is a cheap sublane-offset
        # load; (N, Ho, KD) -> (N*Ho, KD) is a free retile (Ho % 8 == 0).
        lhs = xhp_ref[:, pl.ds(r, Ho), :].reshape(ROWS, KD)
        acc_ref[...] += jnp.dot(lhs, w2_ref[0], preferred_element_type=jnp.float32)

        @pl.when(r == KH - 1)
        def _finish():
            conv = acc_ref[...] + bias_ref[...]                 # in-kernel bias add
            # Fused epilogue sweep: every element of (ROWS, CD) is real data.
            leaky = jnp.where(conv > 0, conv, conv * -0.9)
            total = jnp.sum(leaky)                              # out.sum()
            z = jnp.where(leaky > 0, leaky, total)
            # adaptive_avg_pool2d((1,1)) as two tiny MXU matmuls: average over
            # rows (i) per batch, then sum over the j lane-groups per channel.
            pooled = jnp.dot(p_ref[...], z, preferred_element_type=jnp.float32)
            o_ref[...] = jnp.dot(pooled, q_ref[...],
                                 preferred_element_type=jnp.float32)

    call = pl.pallas_call(
        kernel,
        out_shape=jax.ShapeDtypeStruct((SUB, LANES), jnp.float32),
        grid=(KH,),
        in_specs=[
            pl.BlockSpec((N, H, KD), lambda r: (0, 0, 0)),       # x2 (resident)
            pl.BlockSpec((1, KD, CD), lambda r: (r, 0, 0)),      # w2 row block (pipelined)
            pl.BlockSpec((1, CD), lambda r: (0, 0)),             # bias row
            pl.BlockSpec((SUB, ROWS), lambda r: (0, 0)),         # pool P
            pl.BlockSpec((CD, LANES), lambda r: (0, 0)),         # pool Q
        ],
        out_specs=pl.BlockSpec((SUB, LANES), lambda r: (0, 0)),
        scratch_shapes=[
            pltpu.VMEM((N, Hp, KD), jnp.float32),                # H-padded x slab
            pltpu.VMEM((ROWS, CD), jnp.float32),                 # conv accumulator
        ],
        compiler_params=pltpu.CompilerParams(
            dimension_semantics=("arbitrary",)),
    )

    @jax.jit
    def forward(x):
        # Only host glue: a ~44 KiB relayout of x to (N, H, Ci*W).
        x2 = jnp.transpose(x.astype(jnp.float32), (0, 2, 1, 3)).reshape(N, H, KD)
        out = call(x2, w2, bias2, poolP, poolQ)
        # strip lane/sublane padding; match PyTorch NCHW output (N, Co, 1, 1)
        return out[:N, :Co].reshape(N, Co, 1, 1)

    return forward


def _numpy_reference(x, w, b):
    """Independent NumPy reference of the full forward pass."""
    N, Ci, H, W = x.shape
    _, Co, KH, KW = w.shape
    Ho, Wo = H + KH - 1, W + KW - 1
    conv = np.zeros((N, Co, Ho, Wo), np.float32)
    for r in range(KH):
        for c in range(KW):
            conv[:, :, r:r + H, c:c + W] += np.einsum(
                "nihw,io->nohw", x, w[:, :, r, c])
    conv += b[None, :, None, None]
    out = np.where(conv > 0, conv, conv * -0.9)
    out = np.where(out > 0, out, out.sum(dtype=np.float64).astype(np.float32))
    return out.mean(axis=(2, 3), keepdims=True, dtype=np.float64).astype(np.float32)


if __name__ == "__main__":
    # Small shapes consistent with the module (channels fixed at 12 by the conv).
    N, Ci, Co, H, W = 2, 12, 12, 12, 9
    KH, KW = 5, 8

    key = jax.random.PRNGKey(0)
    kx, kw_, kb = jax.random.split(key, 3)
    x = jax.random.normal(kx, (N, Ci, H, W), dtype=jnp.float32)
    fan = Ci * KH * KW
    weight = jax.random.uniform(kw_, (Ci, Co, KH, KW), jnp.float32,
                                minval=-1.0, maxval=1.0) / np.sqrt(fan)
    bias = jax.random.uniform(kb, (Co,), jnp.float32,
                              minval=-1.0, maxval=1.0) / np.sqrt(fan)

    forward = make_fused_forward(np.asarray(weight), np.asarray(bias), N, H, W)
    out = jax.block_until_ready(forward(x))

    ref = _numpy_reference(np.asarray(x), np.asarray(weight), np.asarray(bias))
    np.testing.assert_allclose(np.asarray(out), ref, rtol=2e-3, atol=2e-3)

    print("KERNEL_OK")
</pallas_src>

<mosaic_0001>
module attributes {stable_mosaic.version = 11 : i64} {
  func.func @kernel(%arg0: i32, %arg1: memref<2x12x108xf32, #tpu.memory_space<vmem>>, %arg2: memref<1x108x192xf32, #tpu.memory_space<vmem>>, %arg3: memref<1x192xf32, #tpu.memory_space<vmem>>, %arg4: memref<8x32xf32, #tpu.memory_space<vmem>>, %arg5: memref<192x128xf32, #tpu.memory_space<vmem>>, %arg6: memref<8x128xf32, #tpu.memory_space<vmem>>, %arg7: memref<2x20x108xf32, #tpu.memory_space<vmem>>, %arg8: memref<32x192xf32, #tpu.memory_space<vmem>>) attributes {dimension_semantics = [#tpu.dimension_semantics<arbitrary>], iteration_bounds = array<i64: 5>, scalar_prefetch = 0 : i64, scratch_operands = 2 : i64, tpu.core_type = #tpu.core_type<tc>, window_params = [{pipeline_mode = #tpu.pipeline_mode<synchronous>, transform_indices = @transform_0, window_bounds = array<i64: 2, 12, 108>}, {transform_indices = @transform_1, window_bounds = array<i64: 1, 108, 192>}, {pipeline_mode = #tpu.pipeline_mode<synchronous>, transform_indices = @transform_2, window_bounds = array<i64: 1, 192>}, {pipeline_mode = #tpu.pipeline_mode<synchronous>, transform_indices = @transform_3, window_bounds = array<i64: 8, 32>}, {pipeline_mode = #tpu.pipeline_mode<synchronous>, transform_indices = @transform_4, window_bounds = array<i64: 192, 128>}, {pipeline_mode = #tpu.pipeline_mode<synchronous>, transform_indices = @transform_5, window_bounds = array<i64: 8, 128>}]} {
    %c0_i32 = arith.constant 0 : i32
    %0 = arith.cmpi eq, %arg0, %c0_i32 : i32
    %1 = arith.extui %0 : i1 to i32
    %c0_i32_0 = arith.constant 0 : i32
    %2 = arith.cmpi ne, %1, %c0_i32_0 : i32
    scf.if %2 {
      %cst_10 = arith.constant 0.000000e+00 : f32
      %15 = vector.broadcast %cst_10 : f32 to vector<2x20x108xf32>
      %c0_11 = arith.constant 0 : index
      %c0_12 = arith.constant 0 : index
      %c0_13 = arith.constant 0 : index
      %16 = vector.load %arg7[%c0_11, %c0_12, %c0_13] : memref<2x20x108xf32, #tpu.memory_space<vmem>>, vector<2x20x108xf32>
      tpu.vector_store %arg7[%c0_11, %c0_12, %c0_13], %15 {strides = array<i32>} : memref<2x20x108xf32, #tpu.memory_space<vmem>>, vector<2x20x108xf32>,
      %c0_14 = arith.constant 0 : index
      %c0_15 = arith.constant 0 : index
      %c0_16 = arith.constant 0 : index
      %17 = vector.load %arg1[%c0_14, %c0_15, %c0_16] : memref<2x12x108xf32, #tpu.memory_space<vmem>>, vector<2x12x108xf32>
      %c0_17 = arith.constant 0 : index
      %c4 = arith.constant 4 : index
      %c0_18 = arith.constant 0 : index
      %18 = vector.load %arg7[%c0_17, %c4, %c0_18] : memref<2x20x108xf32, #tpu.memory_space<vmem>>, vector<2x12x108xf32>
      tpu.vector_store %arg7[%c0_17, %c4, %c0_18], %17 {strides = array<i32>} : memref<2x20x108xf32, #tpu.memory_space<vmem>>, vector<2x12x108xf32>,
      %cst_19 = arith.constant 0.000000e+00 : f32
      %19 = vector.broadcast %cst_19 : f32 to vector<32x192xf32>
      %c0_20 = arith.constant 0 : index
      %c0_21 = arith.constant 0 : index
      %20 = vector.load %arg8[%c0_20, %c0_21] : memref<32x192xf32, #tpu.memory_space<vmem>>, vector<32x192xf32>
      tpu.vector_store %arg8[%c0_20, %c0_21], %19 {strides = array<i32>} : memref<32x192xf32, #tpu.memory_space<vmem>>, vector<32x192xf32>,
    } else {
    }
    %c0 = arith.constant 0 : index
    %3 = arith.index_cast %arg0 : i32 to index
    %c0_1 = arith.constant 0 : index
    %4 = vector.load %arg7[%c0, %3, %c0_1] : memref<2x20x108xf32, #tpu.memory_space<vmem>>, vector<2x16x108xf32>
    %5 = vector.shape_cast %4 : vector<2x16x108xf32> to vector<32x108xf32>
    %c0_2 = arith.constant 0 : index
    %c0_3 = arith.constant 0 : index
    %6 = vector.load %arg8[%c0_2, %c0_3] : memref<32x192xf32, #tpu.memory_space<vmem>>, vector<32x192xf32>
    %c0_4 = arith.constant 0 : index
    %c0_5 = arith.constant 0 : index
    %c0_6 = arith.constant 0 : index
    %7 = vector.load %arg2[%c0_4, %c0_5, %c0_6] : memref<1x108x192xf32, #tpu.memory_space<vmem>>, vector<1x108x192xf32>
    %8 = vector.shape_cast %7 : vector<1x108x192xf32> to vector<108x192xf32>
    %cst = arith.constant dense<0.000000e+00> : vector<32x192xf32>
    %9 = tpu.matmul %5, %8, %cst {dimension_numbers = #tpu.dot_dimension_numbers<[1], [0], [0], [1], [0, 0, 1, 1], [], []>} : vector<32x108xf32>, vector<108x192xf32>, vector<32x192xf32> -> vector<32x192xf32>
    %10 = arith.addf %6, %9 : vector<32x192xf32>
    %c0_7 = arith.constant 0 : index
    %c0_8 = arith.constant 0 : index
    %11 = vector.load %arg8[%c0_7, %c0_8] : memref<32x192xf32, #tpu.memory_space<vmem>>, vector<32x192xf32>
    tpu.vector_store %arg8[%c0_7, %c0_8], %10 {strides = array<i32>} : memref<32x192xf32, #tpu.memory_space<vmem>>, vector<32x192xf32>,
    %c4_i32 = arith.constant 4 : i32
    %12 = arith.cmpi eq, %arg0, %c4_i32 : i32
    %13 = arith.extui %12 : i1 to i32
    %c0_i32_9 = arith.constant 0 : i32
    %14 = arith.cmpi ne, %13, %c0_i32_9 : i32
    scf.if %14 {
      %c0_10 = arith.constant 0 : index
      %c0_11 = arith.constant 0 : index
      %15 = vector.load %arg8[%c0_10, %c0_11] : memref<32x192xf32, #tpu.memory_space<vmem>>, vector<32x192xf32>
      %c0_12 = arith.constant 0 : index
      %c0_13 = arith.constant 0 : index
      %16 = vector.load %arg3[%c0_12, %c0_13] : memref<1x192xf32, #tpu.memory_space<vmem>>, vector<1x192xf32>
      %17 = vector.broadcast %16 : vector<1x192xf32> to vector<32x192xf32>
      %18 = arith.addf %15, %17 : vector<32x192xf32>
      %cst_14 = arith.constant 0.000000e+00 : f32
      %19 = vector.broadcast %cst_14 : f32 to vector<32x192xf32>
      %20 = arith.cmpf ogt, %18, %19 : vector<32x192xf32>
      %cst_15 = arith.constant -0.899999976 : f32
      %21 = vector.broadcast %cst_15 : f32 to vector<32x192xf32>
      %22 = arith.mulf %18, %21 : vector<32x192xf32>
      %23 = arith.select %20, %18, %22 : vector<32x192xi1>, vector<32x192xf32>
      %24 = vector.shape_cast %23 : vector<32x192xf32> to vector<1x32x192xf32>
      %cst_16 = arith.constant dense<0.000000e+00> : vector<1xf32>
      %25 = vector.multi_reduction <add>, %24, %cst_16 [1, 2] : vector<1x32x192xf32> to vector<1xf32>
      %26 = vector.shape_cast %25 : vector<1xf32> to vector<1x1x1xf32>
      %27 = vector.extract %26[0, 0, 0] : f32 from vector<1x1x1xf32>
      %cst_17 = arith.constant 0.000000e+00 : f32
      %28 = vector.broadcast %cst_17 : f32 to vector<32x192xf32>
      %29 = arith.cmpf ogt, %23, %28 : vector<32x192xf32>
      %30 = vector.broadcast %27 : f32 to vector<32x192xf32>
      %31 = arith.select %29, %23, %30 : vector<32x192xi1>, vector<32x192xf32>
      %c0_18 = arith.constant 0 : index
      %c0_19 = arith.constant 0 : index
      %32 = vector.load %arg4[%c0_18, %c0_19] : memref<8x32xf32, #tpu.memory_space<vmem>>, vector<8x32xf32>
      %cst_20 = arith.constant dense<0.000000e+00> : vector<8x192xf32>
      %33 = tpu.matmul %32, %31, %cst_20 {dimension_numbers = #tpu.dot_dimension_numbers<[1], [0], [0], [1], [0, 0, 1, 1], [], []>} : vector<8x32xf32>, vector<32x192xf32>, vector<8x192xf32> -> vector<8x192xf32>
      %c0_21 = arith.constant 0 : index
      %c0_22 = arith.constant 0 : index
      %34 = vector.load %arg5[%c0_21, %c0_22] : memref<192x128xf32, #tpu.memory_space<vmem>>, vector<192x128xf32>
      %cst_23 = arith.constant dense<0.000000e+00> : vector<8x128xf32>
      %35 = tpu.matmul %33, %34, %cst_23 {dimension_numbers = #tpu.dot_dimension_numbers<[1], [0], [0], [1], [0, 0, 1, 1], [], []>} : vector<8x192xf32>, vector<192x128xf32>, vector<8x128xf32> -> vector<8x128xf32>
      %c0_24 = arith.constant 0 : index
      %c0_25 = arith.constant 0 : index
      %36 = vector.load %arg6[%c0_24, %c0_25] : memref<8x128xf32, #tpu.memory_space<vmem>>, vector<8x128xf32>
      tpu.vector_store %arg6[%c0_24, %c0_25], %35 {strides = array<i32>} : memref<8x128xf32, #tpu.memory_space<vmem>>, vector<8x128xf32>,
    } else {
    }
    return
  }
  func.func @transform_0(%arg0: i32) -> (i32, i32, i32) {
    %c0_i32 = arith.constant 0 : i32
    %c0_i32_0 = arith.constant 0 : i32
    %c0_i32_1 = arith.constant 0 : i32
    %c0_i32_2 = arith.constant 0 : i32
    return %c0_i32, %c0_i32_0, %c0_i32_1 : i32, i32, i32
  }
  func.func @transform_1(%arg0: i32) -> (i32, i32, i32) {
    %c0_i32 = arith.constant 0 : i32
    %c0_i32_0 = arith.constant 0 : i32
    %c0_i32_1 = arith.constant 0 : i32
    return %arg0, %c0_i32, %c0_i32_0 : i32, i32, i32
  }
  func.func @transform_2(%arg0: i32) -> (i32, i32) {
    %c0_i32 = arith.constant 0 : i32
    %c0_i32_0 = arith.constant 0 : i32
    %c0_i32_1 = arith.constant 0 : i32
    return %c0_i32, %c0_i32_0 : i32, i32
  }
  func.func @transform_3(%arg0: i32) -> (i32, i32) {
    %c0_i32 = arith.constant 0 : i32
    %c0_i32_0 = arith.constant 0 : i32
    %c0_i32_1 = arith.constant 0 : i32
    return %c0_i32, %c0_i32_0 : i32, i32
  }
  func.func @transform_4(%arg0: i32) -> (i32, i32) {
    %c0_i32 = arith.constant 0 : i32
    %c0_i32_0 = arith.constant 0 : i32
    %c0_i32_1 = arith.constant 0 : i32
    return %c0_i32, %c0_i32_0 : i32, i32
  }
  func.func @transform_5(%arg0: i32) -> (i32, i32) {
    %c0_i32 = arith.constant 0 : i32
    %c0_i32_0 = arith.constant 0 : i32
    %c0_i32_1 = arith.constant 0 : i32
    return %c0_i32, %c0_i32_0 : i32, i32
  }
}

</mosaic_0001>

<llo_original>
// kernel: forward.1
$region0: #{forward.1}
  #allocation0 [shape = 'u32[]', space=smem, size = 0x4, offset = 0x4, fixed_abs, tag = 'smem constant byte address 0x4 - core index']
  #allocation1 [shape = 'u32[72,128]{1,0:T(1,128)}', space=vmem, size = 0x9000, scoped, tag = 'internal scratch']
  #allocation2 [shape = 'f32[2,20,108]{2,1,0:T(8,128)}', space=vmem, size = 0x6000, scoped, tag = 'scratch operand']
  #allocation3 [shape = 'f32[32,192]{1,0:T(8,128)}', space=vmem, size = 0x8000, scoped, tag = 'scratch operand']
  %s0 = inlined_call_operand.vmem [shape: f32[2,12,108], index: 0, kind: input, shape index: {}]
  %s1 = inlined_call_operand.hbm [shape: f32[5,108,192], index: 1, kind: input, shape index: {}]
  %s2 = inlined_call_operand.vmem [shape: f32[1,192], index: 2, kind: input, shape index: {}]
  %s3 = inlined_call_operand.vmem [shape: f32[8,32], index: 3, kind: input, shape index: {}]
  %s4 = inlined_call_operand.vmem [shape: f32[192,128], index: 4, kind: input, shape index: {}]
  %s5 = inlined_call_operand.vmem [shape: f32[8,128], index: 5, kind: output, shape index: {}]
  %s6 = sld [smem:[#allocation0]]
  $region65: #{forward.1} parent=0
    _
  %s8 = ssub.s32 1, %s6
  %s9 = scalar_select 0, %s8, %s6
  $region1: #{forward.1} parent=0
    #allocation4 [shape = 'u8[229376]{0}', space=vmem, size = 0x38000, scoped, tag = 'input window, operand 1']
    #allocation5 [shape = 's32[2]{0}', space=sflag, size = 0x8, scoped, tag = 'scoped memory for forward.1']
    %10 = vsyncpa [#allocation5], 0
    %s11 = scalar_lea.sflag [#allocation5], 1
    %12 = vsyncpa %s11, 0
    loop: start=0, step=1, limit=7
    $region2: #{forward.1} parent=1 // loop_pre_header
      _
    $region3: #{forward.1} parent=1 // loop_header
      %s14 = sphi 0, %s18
      %p15 = scmp.ge.s32.totalorder %s14, 7
      %s22 = sphi 0, %s22
      %s24 = sphi 0, %s22
      %s25 = sphi 0, %s24
      %s39 = sphi 0, %s25
      %s45 = sphi 0, %s47
      %s48 = sphi 0, %s45
      %s49 = sphi 0, %s48
      %s65 = sphi 0, %s49
      %s69 = sphi 0, %s69
      %s71 = sphi 0, %s69
      %s72 = sphi 0, %s71
      %s86 = sphi 0, %s72
      %s90 = sphi 0, %s90
      %s92 = sphi 0, %s90
      %s93 = sphi 0, %s92
      %s107 = sphi 0, %s93
      %s111 = sphi 0, %s111
      %s113 = sphi 0, %s111
      %s114 = sphi 0, %s113
      %s128 = sphi 0, %s114
      %s132 = sphi 0, %s132
      %s134 = sphi 0, %s132
      %s135 = sphi 0, %s134
      %s149 = sphi 0, %s135
    $region4: #{forward.1} parent=1 // loop_header_branch
      %17 = sbr.rel (%p15) target = $region8
    $region5: #{forward.1} parent=1 // loop_body
      %s19 = ssub.s32 %s14, 1
      %s20 = ssub.s32 %s14, 2
      %s21 = sadd.s32 %s14, 1
      %s23 = sadd.s32 %s22, 1
      %p26 = scmp.eq.s32.totalorder %s14, 4
      %p27 = scmp.ne.s32.totalorder %s22, %s24
      %p28 = scmp.eq.s32.totalorder %s14, 0
      %p29 = por %p27, %p28
      %p30 = scmp.ne.s32.totalorder %s22, %s24
      %p31 = scmp.eq.s32.totalorder %s19, 4
      %p32 = por %p30, %p31
      %p33 = scmp.ne.s32.totalorder %s24, %s25
      %p34 = scmp.eq.s32.totalorder %s19, 0
      %p35 = por %p33, %p34
      %p36 = scmp.ne.s32.totalorder %s24, %s25
      %p37 = scmp.eq.s32.totalorder %s20, 4
      %p38 = por %p36, %p37
      %p40 = scmp.ne.s32.totalorder %s25, %s39
      %p41 = scmp.eq.s32.totalorder %s20, 0
      %p42 = por %p40, %p41
      %s43 = ssub.s32 %s14, %s21
      %p44 = scmp.eq.s32.totalorder %s43, 0
      %s46 = sadd.s32 %s45, 1
      %s47 = scalar_select %p44, %s45, %s46
      %p50 = pneg %p44
      %p51 = scmp.eq.s32.totalorder %s14, 4
      %p52 = por %p50, %p51
      %p53 = scmp.ne.s32.totalorder %s45, %s48
      %p54 = scmp.eq.s32.totalorder %s14, 0
      %p55 = por %p53, %p54
      %p56 = scmp.ne.s32.totalorder %s45, %s48
      %p57 = scmp.eq.s32.totalorder %s19, 4
      %p58 = por %p56, %p57
      %p59 = scmp.ne.s32.totalorder %s48, %s49
      %p60 = scmp.eq.s32.totalorder %s19, 0
      %p61 = por %p59, %p60
      %p62 = scmp.ne.s32.totalorder %s48, %s49
      %p63 = scmp.eq.s32.totalorder %s20, 4
      %p64 = por %p62, %p63
      %p66 = scmp.ne.s32.totalorder %s49, %s65
      %p67 = scmp.eq.s32.totalorder %s20, 0
      %p68 = por %p66, %p67
      %s70 = sadd.s32 %s69, 1
      %p73 = scmp.eq.s32.totalorder %s14, 4
      %p74 = scmp.ne.s32.totalorder %s69, %s71
      %p75 = scmp.eq.s32.totalorder %s14, 0
      %p76 = por %p74, %p75
      %p77 = scmp.ne.s32.totalorder %s69, %s71
      %p78 = scmp.eq.s32.totalorder %s19, 4
      %p79 = por %p77, %p78
      %p80 = scmp.ne.s32.totalorder %s71, %s72
      %p81 = scmp.eq.s32.totalorder %s19, 0
      %p82 = por %p80, %p81
      %p83 = scmp.ne.s32.totalorder %s71, %s72
      %p84 = scmp.eq.s32.totalorder %s20, 4
      %p85 = por %p83, %p84
      %p87 = scmp.ne.s32.totalorder %s72, %s86
      %p88 = scmp.eq.s32.totalorder %s20, 0
      %p89 = por %p87, %p88
      %s91 = sadd.s32 %s90, 1
      %p94 = scmp.eq.s32.totalorder %s14, 4
      %p95 = scmp.ne.s32.totalorder %s90, %s92
      %p96 = scmp.eq.s32.totalorder %s14, 0
      %p97 = por %p95, %p96
      %p98 = scmp.ne.s32.totalorder %s90, %s92
      %p99 = scmp.eq.s32.totalorder %s19, 4
      %p100 = por %p98, %p99
      %p101 = scmp.ne.s32.totalorder %s92, %s93
      %p102 = scmp.eq.s32.totalorder %s19, 0
      %p103 = por %p101, %p102
      %p104 = scmp.ne.s32.totalorder %s92, %s93
      %p105 = scmp.eq.s32.totalorder %s20, 4
      %p106 = por %p104, %p105
      %p108 = scmp.ne.s32.totalorder %s93, %s107
      %p109 = scmp.eq.s32.totalorder %s20, 0
      %p110 = por %p108, %p109
      %s112 = sadd.s32 %s111, 1
      %p115 = scmp.eq.s32.totalorder %s14, 4
      %p116 = scmp.ne.s32.totalorder %s111, %s113
      %p117 = scmp.eq.s32.totalorder %s14, 0
      %p118 = por %p116, %p117
      %p119 = scmp.ne.s32.totalorder %s111, %s113
      %p120 = scmp.eq.s32.totalorder %s19, 4
      %p121 = por %p119, %p120
      %p122 = scmp.ne.s32.totalorder %s113, %s114
      %p123 = scmp.eq.s32.totalorder %s19, 0
      %p124 = por %p122, %p123
      %p125 = scmp.ne.s32.totalorder %s113, %s114
      %p126 = scmp.eq.s32.totalorder %s20, 4
      %p127 = por %p125, %p126
      %p129 = scmp.ne.s32.totalorder %s114, %s128
      %p130 = scmp.eq.s32.totalorder %s20, 0
      %p131 = por %p129, %p130
      %s133 = sadd.s32 %s132, 1
      %p136 = scmp.eq.s32.totalorder %s14, 4
      %p137 = scmp.ne.s32.totalorder %s132, %s134
      %p138 = scmp.eq.s32.totalorder %s14, 0
      %p139 = por %p137, %p138
      %p140 = scmp.ne.s32.totalorder %s132, %s134
      %p141 = scmp.eq.s32.totalorder %s19, 4
      %p142 = por %p140, %p141
      %p143 = scmp.ne.s32.totalorder %s134, %s135
      %p144 = scmp.eq.s32.totalorder %s19, 0
      %p145 = por %p143, %p144
      %p146 = scmp.ne.s32.totalorder %s134, %s135
      %p147 = scmp.eq.s32.totalorder %s20, 4
      %p148 = por %p146, %p147
      %p150 = scmp.ne.s32.totalorder %s135, %s149
      %p151 = scmp.eq.s32.totalorder %s20, 0
      %p152 = por %p150, %p151
      %p153 = scmp.le.s32.totalorder 1, %s14
      %p154 = scmp.lt.s32.totalorder %s14, 6
      %p155 = pnand %p153, %p154
      %p156 = pneg %p155
      // Predicated region
      $region9: #{forward.1} parent=5 // pred_check
        _
      $region10: #{forward.1} parent=5 // pred_check_branch
        %158 = sbr.rel (%p155) target = $region12
      $region11: #{forward.1} parent=5 // pred_region
        %s159 = ssub.s32 %s14, 1
        // Predicated region
        $region13: #{forward.1} parent=11 // pred_check
          %p160 = pneg %p35
        $region14: #{forward.1} parent=11 // pred_check_branch
          %162 = sbr.rel (%p160) target = $region16
        $region15: #{forward.1} parent=11 // pred_region
          _
        $region16: #{forward.1} parent=11 // pred_fallthru
          _
        // Predicated region
        $region17: #{forward.1} parent=11 // pred_check
          %p163 = pneg %p82
        $region18: #{forward.1} parent=11 // pred_check_branch
          %165 = sbr.rel (%p163) target = $region20
        $region19: #{forward.1} parent=11 // pred_region
          _
        $region20: #{forward.1} parent=11 // pred_fallthru
          _
        // Predicated region
        $region21: #{forward.1} parent=11 // pred_check
          %p166 = pneg %p103
        $region22: #{forward.1} parent=11 // pred_check_branch
          %168 = sbr.rel (%p166) target = $region24
        $region23: #{forward.1} parent=11 // pred_region
          _
        $region24: #{forward.1} parent=11 // pred_fallthru
          _
        // Predicated region
        $region25: #{forward.1} parent=11 // pred_check
          %p169 = pneg %p124
        $region26: #{forward.1} parent=11 // pred_check_branch
          %171 = sbr.rel (%p169) target = $region28
        $region27: #{forward.1} parent=11 // pred_region
          _
        $region28: #{forward.1} parent=11 // pred_fallthru
          _
      $region12: #{forward.1} parent=5 // pred_fallthru
        _
      %p172 = scmp.lt.s32.totalorder %s14, 5
      // Predicated region
      $region29: #{forward.1} parent=5 // pred_check
        %p173 = pneg %p172
      $region30: #{forward.1} parent=5 // pred_check_branch
        %175 = sbr.rel (%p173) target = $region32
      $region31: #{forward.1} parent=5 // pred_region
        // Predicated region
        $region33: #{forward.1} parent=31 // pred_check
          %p176 = pneg %p55
        $region34: #{forward.1} parent=31 // pred_check_branch
          %178 = sbr.rel (%p176) target = $region36
        $region35: #{forward.1} parent=31 // pred_region
          %s179 = sand.u32 %s45, 1
          %s180 = scalar_lea.sflag [#allocation5], %s179
          %s181 = sand.u32 %s45, 1
          %s182 = smul.addr %s181, 224
          %s183 = scalar_lea.vmem [#allocation4], %s182
          %185 = vsyncadd %s180, 0
          %s186 = smul.addr %s14, 28
          %s187 = smul.addr %s186, 8
          %s188 = scalar_lea.hbm %s1, %s187
          %s189 = sshll.u32 %s188, 4
          %s190 = int_to_ptr.hbm [resolvable:$true] %s189
          %s191 = sshll.u32 %s183, 4
          %s192 = int_to_ptr.vmem [resolvable:$true] %s191
          %197 = dma.hbm_to_vmem [thread:$0]  %s190, 3584, %s192, %s180, 256, 256, 16
        $region36: #{forward.1} parent=31 // pred_fallthru
          _
      $region32: #{forward.1} parent=5 // pred_fallthru
        _
      %p198 = scmp.le.s32.totalorder 1, %s14
      %p199 = scmp.lt.s32.totalorder %s14, 6
      %p200 = pnand %p198, %p199
      %p201 = pneg %p200
      // Predicated region
      $region37: #{forward.1} parent=5 // pred_check
        _
      $region38: #{forward.1} parent=5 // pred_check_branch
        %203 = sbr.rel (%p200) target = $region40
      $region39: #{forward.1} parent=5 // pred_region
        %s204 = ssub.s32 %s14, 1
        %s205 = sand.u32 %s48, 1
        %s206 = scalar_lea.sflag [#allocation5], %s205
        %s207 = sand.u32 %s48, 1
        %s208 = smul.addr %s207, 224
        %s209 = scalar_lea.vmem [#allocation4], %s208
        // Predicated region
        $region41: #{forward.1} parent=39 // pred_check
          %p210 = pneg %p61
        $region42: #{forward.1} parent=39 // pred_check_branch
          %212 = sbr.rel (%p210) target = $region44
        $region43: #{forward.1} parent=39 // pred_region
          %214 = dma.done %s206, 3584
        $region44: #{forward.1} parent=39 // pred_fallthru
          _
        %p215 = pneg %p35
        %p216 = pneg %p32
        %s217 = sand.u32 %s48, 1
        %s218 = scalar_lea.sflag [#allocation5], %s217
        %s219 = sand.u32 %s48, 1
        %s220 = smul.addr %s219, 224
        %s221 = scalar_lea.vmem [#allocation4], %s220
        %p222 = pneg %p61
        %p223 = pneg %p58
        %p224 = pneg %p82
        %p225 = pneg %p79
        %p226 = pneg %p103
        %p227 = pneg %p100
        %p228 = pneg %p124
        %p229 = pneg %p121
        %p230 = pneg %p145
        %p231 = pneg %p142
        %p232 = scmp.eq.s32.totalorder %s19, 0
        // Predicated region
        $region45: #{forward.1} parent=39 // pred_check
          %p233 = pneg %p232
        $region46: #{forward.1} parent=39 // pred_check_branch
          %235 = sbr.rel (%p233) target = $region48
        $region47: #{forward.1} parent=39 // pred_region
          %vm236 = vcmask 883712
          %237 = vst.msk [vmem:[#allocation2] sm:$0xff] %vm236, 0.0
          %238 = vst.msk [vmem:[#allocation2 + $0x8] sm:$0xff] %vm236, 0.0
          %vm239 = vcmask 879616
          %240 = vst.msk [vmem:[#allocation2 + $0x10] sm:$0xf] %vm239, 0.0
          %241 = vst.msk [vmem:[#allocation2 + $0x18] sm:$0xff] %vm236, 0.0
          %242 = vst.msk [vmem:[#allocation2 + $0x20] sm:$0xff] %vm236, 0.0
          %243 = vst.msk [vmem:[#allocation2 + $0x28] sm:$0xf] %vm239, 0.0
          %v244 = vld [vmem:[%s0] sm:$0xff]
          %v245 = vld [vmem:[%s0 + $0x8] sm:$0xf]
          %v246 = vld [vmem:[%s0 + $0x10] sm:$0xff]
          %v247 = vld [vmem:[%s0 + $0x18] sm:$0xf]
          %248 = vst.msk [vmem:[#allocation2 + $0x4] sm:$0xff] %vm236, %v244
          %249 = vst.msk [vmem:[#allocation2 + $0xc] sm:$0xf] %vm239, %v245
          %250 = vst.msk [vmem:[#allocation2 + $0x1c] sm:$0xff] %vm236, %v246
          %251 = vst.msk [vmem:[#allocation2 + $0x24] sm:$0xf] %vm239, %v247
          %252 = vst [vmem:[#allocation3] sm:$0xff] 0.0
          %vm253 = vcmask 523264
          %254 = vst.msk [vmem:[#allocation3 + $0x8] sm:$0xff] %vm253, 0.0
          %255 = vst [vmem:[#allocation3 + $0x10] sm:$0xff] 0.0
          %256 = vst.msk [vmem:[#allocation3 + $0x18] sm:$0xff] %vm253, 0.0
          %257 = vst [vmem:[#allocation3 + $0x20] sm:$0xff] 0.0
          %258 = vst.msk [vmem:[#allocation3 + $0x28] sm:$0xff] %vm253, 0.0
          %259 = vst [vmem:[#allocation3 + $0x30] sm:$0xff] 0.0
          %260 = vst.msk [vmem:[#allocation3 + $0x38] sm:$0xff] %vm253, 0.0
        $region48: #{forward.1} parent=39 // pred_fallthru
          _
        %s261 = scalar_lea.vmem [#allocation2], %s19
        %v262 = vld [vmem:[%s261] sm:$0xff]
        %v263 = vld [vmem:[%s261 + $0x8] sm:$0xff]
        %v264 = vld [vmem:[%s261 + $0x18] sm:$0xff]
        %v265 = vld [vmem:[%s261 + $0x20] sm:$0xff]
        %v266 = vld [vmem:[#allocation3] sm:$0xff]
        %v267 = vld [vmem:[#allocation3 + $0x8] sm:$0xff]
        %v268 = vld [vmem:[#allocation3 + $0x10] sm:$0xff]
        %v269 = vld [vmem:[#allocation3 + $0x18] sm:$0xff]
        %v270 = vld [vmem:[#allocation3 + $0x20] sm:$0xff]
        %v271 = vld [vmem:[#allocation3 + $0x28] sm:$0xff]
        %v272 = vld [vmem:[#allocation3 + $0x30] sm:$0xff]
        %v273 = vld [vmem:[#allocation3 + $0x38] sm:$0xff]
        %v274 = vld [vmem:[%s209] sm:$0xff]
        %v275 = vld [vmem:[%s209 + $0x8] sm:$0xff]
        %v276 = vld [vmem:[%s209 + $0x10] sm:$0xff]
        %v277 = vld [vmem:[%s209 + $0x18] sm:$0xff]
        %v278 = vld [vmem:[%s209 + $0x20] sm:$0xff]
        %v279 = vld [vmem:[%s209 + $0x28] sm:$0xff]
        %v280 = vld [vmem:[%s209 + $0x30] sm:$0xff]
        %v281 = vld [vmem:[%s209 + $0x38] sm:$0xff]
        %v282 = vld [vmem:[%s209 + $0x40] sm:$0xff]
        %v283 = vld [vmem:[%s209 + $0x48] sm:$0xff]
        %v284 = vld [vmem:[%s209 + $0x50] sm:$0xff]
        %v285 = vld [vmem:[%s209 + $0x58] sm:$0xff]
        %v286 = vld [vmem:[%s209 + $0x60] sm:$0xff]
        %v287 = vld [vmem:[%s209 + $0x68] sm:$0xff]
        %v288 = vld [vmem:[%s209 + $0x70] sm:$0xff]
        %v289 = vld [vmem:[%s209 + $0x78] sm:$0xff]
        %v290 = vld [vmem:[%s209 + $0x80] sm:$0xff]
        %v291 = vld [vmem:[%s209 + $0x88] sm:$0xff]
        %v292 = vld [vmem:[%s209 + $0x90] sm:$0xff]
        %v293 = vld [vmem:[%s209 + $0x98] sm:$0xff]
        %v294 = vld [vmem:[%s209 + $0xa0] sm:$0xff]
        %v295 = vld [vmem:[%s209 + $0xa8] sm:$0xff]
        %v296 = vld [vmem:[%s209 + $0xb0] sm:$0xff]
        %v297 = vld [vmem:[%s209 + $0xb8] sm:$0xff]
        %v298 = vld [vmem:[%s209 + $0xc0] sm:$0xff]
        %v299 = vld [vmem:[%s209 + $0xc8] sm:$0xff]
        %v300 = vld [vmem:[%s209 + $0xd0] sm:$0xf]
        %v301 = vld [vmem:[%s209 + $0xd8] sm:$0xf]
        %vm302 = vcmask 883712
        %v304 = vsel %vm302, %v262, 0
        %v307 = vsel %vm302, %v263, 0
        %v310 = vsel %vm302, %v264, 0
        %v313 = vsel %vm302, %v265, 0
        %vm315 = vcmask 1043456
        %v317 = vsel %vm315, %v300, 0
        %v320 = vsel %vm315, %v301, 0
        %322 = vmatpush.msra.mxu0 0.0
        %323 = vmatpush.msra.mxu0 0.0
        %324 = vmatpush.msra.mxu0 %v317
        %325 = vmatpush.msra.mxu0 %v298
        %326 = vmatpush.msra.mxu0 %v296
        %327 = vmatpush.msra.mxu0 %v294
        %328 = vmatpush.msra.mxu0 %v292
        %329 = vmatpush.msra.mxu0 %v290
        %330 = vmatpush.msra.mxu0 %v288
        %331 = vmatpush.msra.mxu0 %v286
        %332 = vmatpush.msra.mxu0 %v284
        %333 = vmatpush.msra.mxu0 %v282
        %334 = vmatpush.msra.mxu0 %v280
        %335 = vmatpush.msra.mxu0 %v278
        %336 = vmatpush.msra.mxu0 %v276
        %337 = vmatpush.msra.mxu0 %v274
        %338 = vmatmul.f32.gmra.mxu0 %v304
        %v339 = vpop.f32.mrf.mxu0
        %v340 = vadd.f32 0.0, %v339
        %341 = vmatmul.f32.gmra.mxu0 %v307
        %v342 = vpop.f32.mrf.mxu0
        %v343 = vadd.f32 0.0, %v342
        %344 = vmatmul.f32.gmra.mxu0 %v310
        %v345 = vpop.f32.mrf.mxu0
        %v346 = vadd.f32 0.0, %v345
        %347 = vmatmul.f32.gmra.mxu0 %v313
        %v348 = vpop.f32.mrf.mxu0
        %v349 = vadd.f32 0.0, %v348
        %350 = vdwg.mxu0
        %351 = vmatpush.msra.mxu0 0.0
        %352 = vmatpush.msra.mxu0 0.0
        %353 = vmatpush.msra.mxu0 %v320
        %354 = vmatpush.msra.mxu0 %v299
        %355 = vmatpush.msra.mxu0 %v297
        %356 = vmatpush.msra.mxu0 %v295
        %357 = vmatpush.msra.mxu0 %v293
        %358 = vmatpush.msra.mxu0 %v291
        %359 = vmatpush.msra.mxu0 %v289
        %360 = vmatpush.msra.mxu0 %v287
        %361 = vmatpush.msra.mxu0 %v285
        %362 = vmatpush.msra.mxu0 %v283
        %363 = vmatpush.msra.mxu0 %v281
        %364 = vmatpush.msra.mxu0 %v279
        %365 = vmatpush.msra.mxu0 %v277
        %366 = vmatpush.msra.mxu0 %v275
        %367 = vmatmul.f32.gmra.mxu0 %v304
        %v368 = vpop.f32.mrf.mxu0
        %v369 = vadd.f32 0.0, %v368
        %370 = vmatmul.f32.gmra.mxu0 %v307
        %v371 = vpop.f32.mrf.mxu0
        %v372 = vadd.f32 0.0, %v371
        %373 = vmatmul.f32.gmra.mxu0 %v310
        %v374 = vpop.f32.mrf.mxu0
        %v375 = vadd.f32 0.0, %v374
        %376 = vmatmul.f32.gmra.mxu0 %v313
        %v377 = vpop.f32.mrf.mxu0
        %v378 = vadd.f32 0.0, %v377
        %379 = vdwg.mxu0
        %v380 = vadd.f32 %v266, %v340
        %v381 = vadd.f32 %v267, %v369
        %v382 = vadd.f32 %v268, %v343
        %v383 = vadd.f32 %v269, %v372
        %v384 = vadd.f32 %v270, %v346
        %v385 = vadd.f32 %v271, %v375
        %v386 = vadd.f32 %v272, %v349
        %v387 = vadd.f32 %v273, %v378
        %388 = vst [vmem:[#allocation3] sm:$0xff] %v380
        %vm389 = vcmask 523264
        %390 = vst.msk [vmem:[#allocation3 + $0x8] sm:$0xff] %vm389, %v381
        %391 = vst [vmem:[#allocation3 + $0x10] sm:$0xff] %v382
        %392 = vst.msk [vmem:[#allocation3 + $0x18] sm:$0xff] %vm389, %v383
        %393 = vst [vmem:[#allocation3 + $0x20] sm:$0xff] %v384
        %394 = vst.msk [vmem:[#allocation3 + $0x28] sm:$0xff] %vm389, %v385
        %395 = vst [vmem:[#allocation3 + $0x30] sm:$0xff] %v386
        %396 = vst.msk [vmem:[#allocation3 + $0x38] sm:$0xff] %vm389, %v387
        %p397 = scmp.eq.s32.totalorder %s19, 4
        // Predicated region
        $region49: #{forward.1} parent=39 // pred_check
          %p398 = pneg %p397
        $region50: #{forward.1} parent=39 // pred_check_branch
          %400 = sbr.rel (%p398) target = $region52
        $region51: #{forward.1} parent=39 // pred_region
          %v401 = vld [vmem:[#allocation3] sm:$0xff]
          %v402 = vld [vmem:[#allocation3 + $0x8] sm:$0xff]
          %v403 = vld [vmem:[#allocation3 + $0x10] sm:$0xff]
          %v404 = vld [vmem:[#allocation3 + $0x18] sm:$0xff]
          %v405 = vld [vmem:[#allocation3 + $0x20] sm:$0xff]
          %v406 = vld [vmem:[#allocation3 + $0x28] sm:$0xff]
          %v407 = vld [vmem:[#allocation3 + $0x30] sm:$0xff]
          %v408 = vld [vmem:[#allocation3 + $0x38] sm:$0xff]
          %v409 = vld [vmem:[%s2] sm:$0x3]
          %v411 = vperm.slane %v409, 0
          %v412 = vperm.slane %v409, 1
          %v415 = vadd.f32 %v401, %v411
          %v416 = vadd.f32 %v402, %v412
          %v417 = vadd.f32 %v403, %v411
          %v418 = vadd.f32 %v404, %v412
          %v419 = vadd.f32 %v405, %v411
          %v420 = vadd.f32 %v406, %v412
          %v421 = vadd.f32 %v407, %v411
          %v422 = vadd.f32 %v408, %v412
          %vm423 = vcmp.gt.f32.partialorder %v415, 0.0
          %vm424 = vcmp.gt.f32.partialorder %v416, 0.0
          %vm425 = vcmp.gt.f32.partialorder %v417, 0.0
          %vm426 = vcmp.gt.f32.partialorder %v418, 0.0
          %vm427 = vcmp.gt.f32.partialorder %v419, 0.0
          %vm428 = vcmp.gt.f32.partialorder %v420, 0.0
          %vm429 = vcmp.gt.f32.partialorder %v421, 0.0
          %vm430 = vcmp.gt.f32.partialorder %v422, 0.0
          %v431 = vmul.f32 %v415, -0.9
          %v432 = vmul.f32 %v416, -0.9
          %v433 = vmul.f32 %v417, -0.9
          %v434 = vmul.f32 %v418, -0.9
          %v435 = vmul.f32 %v419, -0.9
          %v436 = vmul.f32 %v420, -0.9
          %v437 = vmul.f32 %v421, -0.9
          %v438 = vmul.f32 %v422, -0.9
          %v439 = vsel %vm423, %v415, %v431
          %v440 = vsel %vm424, %v416, %v432
          %v441 = vsel %vm425, %v417, %v433
          %v442 = vsel %vm426, %v418, %v434
          %v443 = vsel %vm427, %v419, %v435
          %v444 = vsel %vm428, %v420, %v436
          %v445 = vsel %vm429, %v421, %v437
          %v446 = vsel %vm430, %v422, %v438
          %v447 = vsel %vm389, %v440, 0.0
          %v448 = vadd.f32 %v439, %v447
          %v449 = vadd.f32 %v448, %v441
          %v450 = vsel %vm389, %v442, 0.0
          %v451 = vadd.f32 %v449, %v450
          %v452 = vadd.f32 %v451, %v443
          %v453 = vsel %vm389, %v444, 0.0
          %v454 = vadd.f32 %v452, %v453
          %v455 = vadd.f32 %v454, %v445
          %v456 = vsel %vm389, %v446, 0.0
          %v457 = vadd.f32 %v455, %v456
          %458 = vadd.xlane.f32.xlu0 %v457
          %v459 = vpop.xlane.xlu0 %458
          %v460 = vrot.slane %v459, 4
          %v461 = vadd.f32 %v459, %v460
          %v462 = vrot.slane %v461, 2
          %v463 = vadd.f32 %v461, %v462
          %v464 = vrot.slane %v463, 1
          %v465 = vadd.f32 %v463, %v464
          %s466 = vtos %v465
          %vm467 = vcmp.gt.f32.partialorder %v439, 0.0
          %vm468 = vcmp.gt.f32.partialorder %v440, 0.0
          %vm469 = vcmp.gt.f32.partialorder %v441, 0.0
          %vm470 = vcmp.gt.f32.partialorder %v442, 0.0
          %vm471 = vcmp.gt.f32.partialorder %v443, 0.0
          %vm472 = vcmp.gt.f32.partialorder %v444, 0.0
          %vm473 = vcmp.gt.f32.partialorder %v445, 0.0
          %vm474 = vcmp.gt.f32.partialorder %v446, 0.0
          %v475 = vstv %s466
          %v476 = vsel %vm467, %v439, %v475
          %v477 = vsel %vm468, %v440, %v475
          %v478 = vsel %vm469, %v441, %v475
          %v479 = vsel %vm470, %v442, %v475
          %v480 = vsel %vm471, %v443, %v475
          %v481 = vsel %vm472, %v444, %v475
          %v482 = vsel %vm473, %v445, %v475
          %v483 = vsel %vm474, %v446, %v475
          %v484 = vld [vmem:[%s3] sm:$0xff]
          %vm485 = vcmask 261120
          %v487 = vsel %vm485, %v484, 0
          %489 = vmatpush.msra.mxu0 0.0
          %490 = vmatpush.msra.mxu0 0.0
          %491 = vmatpush.msra.mxu0 0.0
          %492 = vmatpush.msra.mxu0 0.0
          %493 = vmatpush.msra.mxu0 0.0
          %494 = vmatpush.msra.mxu0 0.0
          %495 = vmatpush.msra.mxu0 0.0
          %496 = vmatpush.msra.mxu0 0.0
          %497 = vmatpush.msra.mxu0 0.0
          %498 = vmatpush.msra.mxu0 0.0
          %499 = vmatpush.msra.mxu0 0.0
          %500 = vmatpush.msra.mxu0 0.0
          %501 = vmatpush.msra.mxu0 %v482
          %502 = vmatpush.msra.mxu0 %v480
          %503 = vmatpush.msra.mxu0 %v478
          %504 = vmatpush.msra.mxu0 %v476
          %505 = vmatmul.f32.gmra.mxu0 %v487
          %v506 = vpop.f32.mrf.mxu0
          %v507 = vadd.f32 0.0, %v506
          %508 = vdwg.mxu0
          %509 = vmatpush.msra.mxu0 0.0
          %510 = vmatpush.msra.mxu0 0.0
          %511 = vmatpush.msra.mxu0 0.0
          %512 = vmatpush.msra.mxu0 0.0
          %513 = vmatpush.msra.mxu0 0.0
          %514 = vmatpush.msra.mxu0 0.0
          %515 = vmatpush.msra.mxu0 0.0
          %516 = vmatpush.msra.mxu0 0.0
          %517 = vmatpush.msra.mxu0 0.0
          %518 = vmatpush.msra.mxu0 0.0
          %519 = vmatpush.msra.mxu0 0.0
          %520 = vmatpush.msra.mxu0 0.0
          %521 = vmatpush.msra.mxu0 %v483
          %522 = vmatpush.msra.mxu0 %v481
          %523 = vmatpush.msra.mxu0 %v479
          %524 = vmatpush.msra.mxu0 %v477
          %525 = vmatmul.f32.gmra.mxu0 %v487
          %v526 = vpop.f32.mrf.mxu0
          %v527 = vadd.f32 0.0, %v526
          %528 = vdwg.mxu0
          %v529 = vld [vmem:[%s4] sm:$0xff]
          %v530 = vld [vmem:[%s4 + $0x8] sm:$0xff]
          %v531 = vld [vmem:[%s4 + $0x10] sm:$0xff]
          %v532 = vld [vmem:[%s4 + $0x18] sm:$0xff]
          %v533 = vld [vmem:[%s4 + $0x20] sm:$0xff]
          %v534 = vld [vmem:[%s4 + $0x28] sm:$0xff]
          %v535 = vld [vmem:[%s4 + $0x30] sm:$0xff]
          %v536 = vld [vmem:[%s4 + $0x38] sm:$0xff]
          %v537 = vld [vmem:[%s4 + $0x40] sm:$0xff]
          %v538 = vld [vmem:[%s4 + $0x48] sm:$0xff]
          %v539 = vld [vmem:[%s4 + $0x50] sm:$0xff]
          %v540 = vld [vmem:[%s4 + $0x58] sm:$0xff]
          %v541 = vld [vmem:[%s4 + $0x60] sm:$0xff]
          %v542 = vld [vmem:[%s4 + $0x68] sm:$0xff]
          %v543 = vld [vmem:[%s4 + $0x70] sm:$0xff]
          %v544 = vld [vmem:[%s4 + $0x78] sm:$0xff]
          %v545 = vld [vmem:[%s4 + $0x80] sm:$0xff]
          %v546 = vld [vmem:[%s4 + $0x88] sm:$0xff]
          %v547 = vld [vmem:[%s4 + $0x90] sm:$0xff]
          %v548 = vld [vmem:[%s4 + $0x98] sm:$0xff]
          %v549 = vld [vmem:[%s4 + $0xa0] sm:$0xff]
          %v550 = vld [vmem:[%s4 + $0xa8] sm:$0xff]
          %v551 = vld [vmem:[%s4 + $0xb0] sm:$0xff]
          %v552 = vld [vmem:[%s4 + $0xb8] sm:$0xff]
          %v554 = vsel %vm389, %v527, 0
          %556 = vmatpush.msra.mxu0 %v544
          %557 = vmatpush.msra.mxu0 %v543
          %558 = vmatpush.msra.mxu0 %v542
          %559 = vmatpush.msra.mxu0 %v541
          %560 = vmatpush.msra.mxu0 %v540
          %561 = vmatpush.msra.mxu0 %v539
          %562 = vmatpush.msra.mxu0 %v538
          %563 = vmatpush.msra.mxu0 %v537
          %564 = vmatpush.msra.mxu0 %v536
          %565 = vmatpush.msra.mxu0 %v535
          %566 = vmatpush.msra.mxu0 %v534
          %567 = vmatpush.msra.mxu0 %v533
          %568 = vmatpush.msra.mxu0 %v532
          %569 = vmatpush.msra.mxu0 %v531
          %570 = vmatpush.msra.mxu0 %v530
          %571 = vmatpush.msra.mxu0 %v529
          %572 = vmatmul.f32.gmra.mxu0 %v507
          %v573 = vpop.f32.mrf.mxu0
          %v574 = vadd.f32 0.0, %v573
          %575 = vdwg.mxu0
          %576 = vmatpush.msra.mxu0 0.0
          %577 = vmatpush.msra.mxu0 0.0
          %578 = vmatpush.msra.mxu0 0.0
          %579 = vmatpush.msra.mxu0 0.0
          %580 = vmatpush.msra.mxu0 0.0
          %581 = vmatpush.msra.mxu0 0.0
          %582 = vmatpush.msra.mxu0 0.0
          %583 = vmatpush.msra.mxu0 0.0
          %584 = vmatpush.msra.mxu0 %v552
          %585 = vmatpush.msra.mxu0 %v551
          %586 = vmatpush.msra.mxu0 %v550
          %587 = vmatpush.msra.mxu0 %v549
          %588 = vmatpush.msra.mxu0 %v548
          %589 = vmatpush.msra.mxu0 %v547
          %590 = vmatpush.msra.mxu0 %v546
          %591 = vmatpush.msra.mxu0 %v545
          %592 = vmatmul.f32.gmra.mxu0 %v554
          %v593 = vpop.f32.mrf.mxu0
          %v594 = vadd.f32 %v574, %v593
          %595 = vdwg.mxu0
          %596 = vst [vmem:[%s5] sm:$0xff] %v594
        $region52: #{forward.1} parent=39 // pred_fallthru
          _
        // Predicated region
        $region53: #{forward.1} parent=39 // pred_check
          %p597 = pneg %p142
        $region54: #{forward.1} parent=39 // pred_check_branch
          %599 = sbr.rel (%p597) target = $region56
        $region55: #{forward.1} parent=39 // pred_region
          _
        $region56: #{forward.1} parent=39 // pred_fallthru
          _
        // Predicated region
        $region57: #{forward.1} parent=39 // pred_check
          %p600 = pneg %p142
        $region58: #{forward.1} parent=39 // pred_check_branch
          %602 = sbr.rel (%p600) target = $region60
        $region59: #{forward.1} parent=39 // pred_region
          _
        $region60: #{forward.1} parent=39 // pred_fallthru
          _
      $region40: #{forward.1} parent=5 // pred_fallthru
        _
      %p603 = scmp.le.s32.totalorder 2, %s14
      // Predicated region
      $region61: #{forward.1} parent=5 // pred_check
        %p604 = pneg %p603
      $region62: #{forward.1} parent=5 // pred_check_branch
        %606 = sbr.rel (%p604) target = $region64
      $region63: #{forward.1} parent=5 // pred_region
        %s607 = ssub.s32 %s14, 2
      $region64: #{forward.1} parent=5 // pred_fallthru
        _
    $region6: #{forward.1} parent=1 // loop_footer
      %s18 = sadd.s32 1, %s14
    $region7: #{forward.1} parent=1 // loop_footer_branch
      %13 = sbr.rel target = $region3
    $region8: #{forward.1} parent=1 // loop_exit
      _
    %608 = vsyncpa [#allocation5], 1
    %s609 = scalar_lea.sflag [#allocation5], 1
    %610 = vsyncpa %s609, 1

</llo_original>
